<compile_context>
chip_gen: v7x
topology: tpu7x:2x2x1
jax: 0.10.0
libtpu: 0.0.40
codegen_flags: <defaults>
</compile_context>

<pallas_src>
import math
import numpy as np
import jax
import jax.numpy as jnp
from jax.experimental import pallas as pl
from jax.experimental.pallas import tpu as pltpu


# ---------------------------------------------------------------------------
# Graph structure helpers (numpy glue — parameter/structure setup, not the hot
# path; mirrors Graph.add_self_loops and Graph.expand exactly).
# ---------------------------------------------------------------------------
def add_self_loops(num_nodes, indices, edge_types, start=0):
    loops = np.arange(start, num_nodes, dtype=np.int64)
    idx_pre = np.stack([loops, loops])
    et_pre = np.ones_like(loops)
    indices = np.concatenate([idx_pre, indices], axis=-1)
    edge_types = np.concatenate([et_pre, edge_types + 1], axis=-1)
    return indices, edge_types


def expand_edges(indices, edge_types, target_dim, source_dim):
    """Replicates Graph.expand: each edge -> (target_dim x source_dim) block of
    distinct edge types (C-order flatten, identical to the torch code)."""
    t_nodes = indices[0][:, None, None]
    s_nodes = indices[1][:, None, None]
    et = edge_types[:, None, None]
    t_inds = np.arange(target_dim)[None, :, None]
    s_inds = np.arange(source_dim)[None, None, :]
    shape = (indices.shape[1], target_dim, source_dim)
    t_ext = np.broadcast_to(t_nodes * target_dim + t_inds, shape)
    s_ext = np.broadcast_to(s_nodes * source_dim + s_inds, shape)
    et_ext = np.broadcast_to(
        ((et - 1) * target_dim + t_inds) * source_dim + s_inds + 1, shape)
    return (t_ext.reshape(-1).astype(np.int32),
            s_ext.reshape(-1).astype(np.int32),
            et_ext.reshape(-1).astype(np.int32))


def dense_from_sparse(t_idx, s_idx, values, shape):
    # torch.sparse COO sums duplicate indices -> scatter-add into dense.
    return jnp.zeros(shape, dtype=values.dtype).at[t_idx, s_idx].add(values)


def _round_up(v, m):
    return ((v + m - 1) // m) * m


def _pad2d(a, rows, cols):
    pr, pc = rows - a.shape[0], cols - a.shape[1]
    if pr == 0 and pc == 0:
        return a
    return jnp.pad(a, ((0, pr), (0, pc)))


# ---------------------------------------------------------------------------
# Kernels.  Scalar-prefetch refs (kids, cnt) arrive first, then inputs/outputs.
#   general : per (t, b) output tile, iterate the padded nonzero-K-block list,
#             skip padded steps with pl.when, accumulate in f32 VMEM scratch.
#   single  : every T-tile has exactly one nonzero K-block -> fused write,
#             no accumulator round trip.
# ---------------------------------------------------------------------------
def _gcn_kernel_acc(kids_ref, cnt_ref, w_ref, x_ref, bias_ref, o_ref, acc_ref):
    t = pl.program_id(0)
    k = pl.program_id(2)

    @pl.when(k == 0)
    def _():
        # seed accumulator with the per-row bias row-sum, broadcast over batch lanes
        acc_ref[...] = jnp.broadcast_to(bias_ref[...], acc_ref.shape)

    @pl.when(k < cnt_ref[t])
    def _():
        acc_ref[...] += jnp.dot(w_ref[...], x_ref[...],
                                preferred_element_type=jnp.float32)

    @pl.when(k == pl.num_programs(2) - 1)
    def _():
        o_ref[...] = acc_ref[...].astype(o_ref.dtype)


def _gcn_kernel_single(kids_ref, cnt_ref, w_ref, x_ref, bias_ref, o_ref):
    del kids_ref, cnt_ref
    o_ref[...] = (jnp.dot(w_ref[...], x_ref[...],
                          preferred_element_type=jnp.float32)
                  + bias_ref[...]).astype(o_ref.dtype)


# ---------------------------------------------------------------------------
# Parameter-setup (done once, reused across forward calls): pad + cast W,
# precompute the bias row-sum column and the block-sparse K schedule.
# ---------------------------------------------------------------------------
def prepare_graph_conv(w_dense, b_dense, *, tm=256, tk=512,
                       compute_dtype=jnp.bfloat16):
    T, S = w_dense.shape
    T_128 = _round_up(T, 128)
    S_128 = _round_up(S, 128)
    tm = min(_round_up(tm, 128), T_128)
    tk = min(_round_up(tk, 128), S_128)
    # v7x megacore: prefer >= 2 row tiles when possible so the parallel grid
    # axes never collapse to a single iteration.
    if T_128 // tm < 2 and tm > 128:
        tm = max(128, tm // 2)
    T_pad = _round_up(T_128, tm)
    S_pad = _round_up(S_128, tk)

    w_np = np.zeros((T_pad, S_pad), dtype=np.float32)
    w_np[:T, :S] = np.asarray(w_dense, dtype=np.float32)

    nt, nk = T_pad // tm, S_pad // tk
    block_nz = (w_np.reshape(nt, tm, nk, tk) != 0).any(axis=(1, 3))
    counts = block_nz.sum(axis=1).astype(np.int32)
    max_cnt = max(int(counts.max()), 1)
    kids = np.zeros((nt, max_cnt), dtype=np.int32)
    for t in range(nt):
        nz = np.nonzero(block_nz[t])[0].astype(np.int32)
        c = int(counts[t])
        kids[t, :c] = nz
        if c > 0:
            kids[t, c:] = nz[-1]        # repeat last block -> revisit, no extra DMA

    b_row = np.asarray(b_dense, dtype=np.float32).sum(axis=1)    # (T,)
    bias_col = np.zeros((T_pad, 1), dtype=np.float32)
    bias_col[:T, 0] = b_row

    return dict(
        w=jnp.asarray(w_np, dtype=compute_dtype),                # (T_pad, S_pad)
        bias_col=jnp.asarray(bias_col),                          # (T_pad, 1) f32
        kblock_ids=jnp.asarray(kids.reshape(-1)),                # flat SMEM-friendly
        kblock_counts=jnp.asarray(counts),
        tm=tm, tk=tk, T=T, S=S, T_pad=T_pad, S_pad=S_pad,
        num_k_steps=max_cnt,
        all_single=bool(counts.min() == 1 and max_cnt == 1),
        compute_dtype=compute_dtype,
    )


# ---------------------------------------------------------------------------
# Forward:  y = W @ x + rowsum(Bmat)   (x: (S, batch) -> y: (T, batch))
# ---------------------------------------------------------------------------
def graph_conv_forward(params, x, *, tb=512):
    T, S = params["T"], params["S"]
    assert x.shape[0] == S
    Bsz = x.shape[1]
    tm, tk = params["tm"], params["tk"]
    T_pad, S_pad = params["T_pad"], params["S_pad"]
    nk_steps = params["num_k_steps"]

    B_128 = _round_up(Bsz, 128)
    tb = min(_round_up(tb, 128), B_128)
    B_pad = _round_up(B_128, tb)

    x_p = _pad2d(x.astype(params["compute_dtype"]), S_pad, B_pad)

    nt, nb = T_pad // tm, B_pad // tb
    grid = (nt, nb, nk_steps)

    # scalar-prefetch refs arrive as trailing positional args of every index_map
    w_spec = pl.BlockSpec(
        (tm, tk), lambda t, b, k, kids, cnt: (t, kids[t * nk_steps + k]))
    x_spec = pl.BlockSpec(
        (tk, tb), lambda t, b, k, kids, cnt: (kids[t * nk_steps + k], b))
    bias_spec = pl.BlockSpec((tm, 1), lambda t, b, k, kids, cnt: (t, 0))
    out_spec = pl.BlockSpec((tm, tb), lambda t, b, k, kids, cnt: (t, b))

    single = params["all_single"]
    kernel = _gcn_kernel_single if single else _gcn_kernel_acc
    scratch = [] if single else [pltpu.VMEM((tm, tb), jnp.float32)]

    in_bytes = jnp.dtype(params["compute_dtype"]).itemsize
    work = (2 * (tm * tk + tk * tb) * in_bytes       # double-buffered W / x tiles
            + 2 * tm * 4                             # bias column
            + 2 * tm * tb * 4                        # double-buffered output tile
            + (0 if single else tm * tb * 4))        # f32 accumulator
    vmem_limit = int(min(48 * 1024 * 1024, max(16 * 1024 * 1024, 3 * work)))

    y_pad = pl.pallas_call(
        kernel,
        out_shape=jax.ShapeDtypeStruct((T_pad, B_pad), x.dtype),
        grid_spec=pltpu.PrefetchScalarGridSpec(
            num_scalar_prefetch=2,
            grid=grid,
            in_specs=[w_spec, x_spec, bias_spec],
            out_specs=out_spec,
            scratch_shapes=scratch,
        ),
        compiler_params=pltpu.CompilerParams(
            dimension_semantics=("parallel", "parallel", "arbitrary"),
            vmem_limit_bytes=vmem_limit),
    )(params["kblock_ids"], params["kblock_counts"],
      params["w"], x_p, params["bias_col"])

    return y_pad[:T, :Bsz]


if __name__ == "__main__":
    # ---- synthetic graph (DAG on N nodes, 2 edge types before self-loops) ----
    N = 16
    in_features = 16
    out_features = 16
    batch = 64

    chain_t = np.arange(1, N, dtype=np.int64)          # i-1 -> i
    chain_s = np.arange(0, N - 1, dtype=np.int64)
    skip_t = np.array([2, 5, 9, 13], dtype=np.int64)   # a few skip edges
    skip_s = np.array([0, 1, 4, 8], dtype=np.int64)
    indices = np.stack([np.concatenate([chain_t, skip_t]),
                        np.concatenate([chain_s, skip_s])])
    edge_types = np.concatenate([np.ones(N - 1, dtype=np.int64),
                                 np.full(skip_t.shape[0], 2, dtype=np.int64)])

    # self_loop=True -> GraphConvLayer adds self loops (type 1, others shifted +1)
    indices, edge_types = add_self_loops(N, indices, edge_types, start=0)
    max_edge_type = int(edge_types.max())

    # ---- deterministic parameters (mirrors reset_parameters) ----
    bound = 1.0 / math.sqrt(in_features)
    key = jax.random.PRNGKey(0)
    k_w, k_b, k_x = jax.random.split(key, 3)
    weight_vector = jax.random.uniform(
        k_w, (max_edge_type * out_features * in_features,),
        minval=-bound, maxval=bound, dtype=jnp.float32)
    bias_vector = jax.random.uniform(
        k_b, (max_edge_type * out_features * 1,),
        minval=-bound, maxval=bound, dtype=jnp.float32)

    # ---- materialize dense weight / bias matrices (sparse_matrix equivalent) ----
    T = N * out_features            # 256
    S = N * in_features             # 256
    wt, ws, wet = expand_edges(indices, edge_types, out_features, in_features)
    w_dense = dense_from_sparse(wt, ws, weight_vector[wet - 1], (T, S))
    bt, bs, bet = expand_edges(indices, edge_types, out_features, 1)
    b_dense = dense_from_sparse(bt, bs, bias_vector[bet - 1], (T, N))

    # ---- input x: [S, B] = [num_nodes * in_features, batch] ----
    x = jax.random.normal(k_x, (S, batch), dtype=jnp.float32)

    # ---- reference (plain JAX) ----
    y_ref = w_dense @ x + jnp.sum(b_dense, axis=1, keepdims=True)
    y_ref = np.asarray(jax.block_until_ready(y_ref))

    # (1) default config: bf16 inputs, large tiles -> single-K fused fast path
    params_fast = prepare_graph_conv(w_dense, b_dense, tm=256, tk=512,
                                     compute_dtype=jnp.bfloat16)
    y1 = graph_conv_forward(params_fast, x, tb=512)
    y1 = np.asarray(jax.block_until_ready(y1))

    # (2) small tiles: exercises the block-sparse ragged-K accumulator path (f32)
    params_bs = prepare_graph_conv(w_dense, b_dense, tm=128, tk=128,
                                   compute_dtype=jnp.float32)
    y2 = graph_conv_forward(params_bs, x, tb=128)
    y2 = np.asarray(jax.block_until_ready(y2))

    y_ref_np = np.asarray(y_ref)
    if not np.allclose(y1, y_ref_np, rtol=2e-2, atol=5e-2):
        raise AssertionError("Pallas GraphConvLayer (bf16 fast path) mismatch vs reference")
    if not np.allclose(y2, y_ref_np, rtol=1e-4, atol=1e-4):
        raise AssertionError("Pallas GraphConvLayer (block-sparse f32 path) mismatch vs reference")

    print("KERNEL_OK")
</pallas_src>

<mosaic_0001>
module attributes {stable_mosaic.version = 11 : i64} {
  func.func @_gcn_kernel_single(%arg0: i32, %arg1: i32, %arg2: i32, %arg3: memref<2xi32, #tpu.memory_space<smem>>, %arg4: memref<2xi32, #tpu.memory_space<smem>>, %arg5: memref<128x256xbf16, #tpu.memory_space<vmem>>, %arg6: memref<256x128xbf16, #tpu.memory_space<vmem>>, %arg7: memref<128x1xf32, #tpu.memory_space<vmem>>, %arg8: memref<128x128xf32, #tpu.memory_space<vmem>>) attributes {dimension_semantics = [#tpu.dimension_semantics<parallel>, #tpu.dimension_semantics<parallel>, #tpu.dimension_semantics<arbitrary>], iteration_bounds = array<i64: 2, 1, 1>, scalar_prefetch = 2 : i64, scratch_operands = 0 : i64, tpu.core_type = #tpu.core_type<tc>, window_params = [{transform_indices = @transform_0, window_bounds = array<i64: 128, 256>}, {transform_indices = @transform_1, window_bounds = array<i64: 256, 128>}, {transform_indices = @transform_2, window_bounds = array<i64: 128, 1>}, {transform_indices = @transform_3, window_bounds = array<i64: 128, 128>}]} {
    %c0 = arith.constant 0 : index
    %c0_0 = arith.constant 0 : index
    %0 = vector.load %arg5[%c0, %c0_0] : memref<128x256xbf16, #tpu.memory_space<vmem>>, vector<128x256xbf16>
    %c0_1 = arith.constant 0 : index
    %c0_2 = arith.constant 0 : index
    %1 = vector.load %arg6[%c0_1, %c0_2] : memref<256x128xbf16, #tpu.memory_space<vmem>>, vector<256x128xbf16>
    %cst = arith.constant dense<0.000000e+00> : vector<128x128xf32>
    %2 = tpu.matmul %0, %1, %cst {dimension_numbers = #tpu.dot_dimension_numbers<[1], [0], [0], [1], [0, 0, 1, 1], [], []>} : vector<128x256xbf16>, vector<256x128xbf16>, vector<128x128xf32> -> vector<128x128xf32>
    %c0_3 = arith.constant 0 : index
    %c0_4 = arith.constant 0 : index
    %3 = vector.load %arg7[%c0_3, %c0_4] : memref<128x1xf32, #tpu.memory_space<vmem>>, vector<128x1xf32>
    %4 = vector.broadcast %3 : vector<128x1xf32> to vector<128x128xf32>
    %5 = arith.addf %2, %4 : vector<128x128xf32>
    %c0_5 = arith.constant 0 : index
    %c0_6 = arith.constant 0 : index
    %6 = vector.load %arg8[%c0_5, %c0_6] : memref<128x128xf32, #tpu.memory_space<vmem>>, vector<128x128xf32>
    tpu.vector_store %arg8[%c0_5, %c0_6], %5 {strides = array<i32>} : memref<128x128xf32, #tpu.memory_space<vmem>>, vector<128x128xf32>,
    return
  }
  func.func @transform_0(%arg0: i32, %arg1: i32, %arg2: i32, %arg3: memref<2xi32, #tpu.memory_space<smem>>, %arg4: memref<2xi32, #tpu.memory_space<smem>>) -> (i32, i32) {
    %c1_i32 = arith.constant 1 : i32
    %0 = arith.muli %arg0, %c1_i32 : i32
    %1 = arith.addi %0, %arg2 : i32
    %2 = arith.index_cast %1 : i32 to index
    %3 = memref.load %arg3[%2] : memref<2xi32, #tpu.memory_space<smem>>
    %c0_i32 = arith.constant 0 : i32
    return %arg0, %3 : i32, i32
  }
  func.func @transform_1(%arg0: i32, %arg1: i32, %arg2: i32, %arg3: memref<2xi32, #tpu.memory_space<smem>>, %arg4: memref<2xi32, #tpu.memory_space<smem>>) -> (i32, i32) {
    %c1_i32 = arith.constant 1 : i32
    %0 = arith.muli %arg0, %c1_i32 : i32
    %1 = arith.addi %0, %arg2 : i32
    %2 = arith.index_cast %1 : i32 to index
    %3 = memref.load %arg3[%2] : memref<2xi32, #tpu.memory_space<smem>>
    %c0_i32 = arith.constant 0 : i32
    return %3, %arg1 : i32, i32
  }
  func.func @transform_2(%arg0: i32, %arg1: i32, %arg2: i32, %arg3: memref<2xi32, #tpu.memory_space<smem>>, %arg4: memref<2xi32, #tpu.memory_space<smem>>) -> (i32, i32) {
    %c0_i32 = arith.constant 0 : i32
    %c0_i32_0 = arith.constant 0 : i32
    return %arg0, %c0_i32 : i32, i32
  }
  func.func @transform_3(%arg0: i32, %arg1: i32, %arg2: i32, %arg3: memref<2xi32, #tpu.memory_space<smem>>, %arg4: memref<2xi32, #tpu.memory_space<smem>>) -> (i32, i32) {
    %c0_i32 = arith.constant 0 : i32
    return %arg0, %arg1 : i32, i32
  }
}

</mosaic_0001>

<llo_original>
// kernel: tpu_custom_call.1
$region0: #{tpu_custom_call.1}
  #allocation0 [shape = 'u32[]', space=smem, size = 0x4, offset = 0x4, fixed_abs, tag = 'smem constant byte address 0x4 - core index']
  #allocation1 [shape = 'u32[144,128]{1,0:T(1,128)}', space=vmem, size = 0x12000, scoped, tag = 'internal scratch']
  #allocation2 [shape = 's32[1]{0}', space=sflag, size = 0x4, scoped, tag = 'scoped memory for tpu_custom_call.1']
  #allocation3 [shape = 'u8[512]{0}', space=smem, size = 0x200, scoped, tag = 'prefetched SMEM operand 0']
  #allocation4 [shape = 'u8[512]{0}', space=smem, size = 0x200, scoped, tag = 'prefetched SMEM operand 1']
  %s0 = inlined_call_operand.vmem [shape: s32[2], index: 0, kind: input, shape index: {}]
  %s1 = inlined_call_operand.vmem [shape: s32[2], index: 1, kind: input, shape index: {}]
  %s2 = inlined_call_operand.vmem [shape: bf16[256,256], index: 2, kind: input, shape index: {}]
  %s3 = inlined_call_operand.hbm [shape: bf16[256,128], index: 3, kind: input, shape index: {}]
  %s4 = inlined_call_operand.vmem [shape: f32[256,1], index: 4, kind: input, shape index: {}]
  %s5 = inlined_call_operand.hbm [shape: f32[256,128], index: 5, kind: output, shape index: {}]
  %s6 = sld [smem:[#allocation0]]
  $region49: #{tpu_custom_call.1} parent=0
    _
  %s8 = ssub.s32 1, %s6
  %s9 = scalar_select 0, %s8, %s6
  %s10 = sshll.u32 %s0, 4
  %s11 = int_to_ptr.vmem [resolvable:$true] %s10
  %13 = dma.vmem_to_smem %s11, 16, [#allocation3], [#allocation2]
  %s14 = sshll.u32 %s1, 4
  %s15 = int_to_ptr.vmem [resolvable:$true] %s14
  %17 = dma.vmem_to_smem %s15, 16, [#allocation4], [#allocation2]
  %18 = dma.done [#allocation2], 32
  %19 = sfence
  $region1: #{tpu_custom_call.1} parent=0
    #allocation5 [shape = 'u8[131072]{0}', space=vmem, size = 0x20000, scoped, tag = 'input window, operand 3']
    #allocation6 [shape = 's32[2]{0}', space=sflag, size = 0x8, scoped, tag = 'scoped memory for tpu_custom_call.1']
    #allocation7 [shape = 's32[2]{0}', space=sflag, size = 0x8, scoped, tag = 'scoped memory for tpu_custom_call.1']
    #allocation8 [shape = 'u8[131072]{0}', space=vmem, size = 0x20000, scoped, tag = 'output window, operand 0']
    %20 = vsyncpa [#allocation6], 0
    %s21 = scalar_lea.sflag [#allocation6], 1
    %22 = vsyncpa %s21, 0
    %23 = vsyncpa [#allocation7], 0
    %s24 = scalar_lea.sflag [#allocation7], 1
    %25 = vsyncpa %s24, 0
    loop: start=0, step=1, limit=4
    $region2: #{tpu_custom_call.1} parent=1 // loop_pre_header
      _
    $region3: #{tpu_custom_call.1} parent=1 // loop_header
      %s27 = sphi 0, %s31
      %p28 = scmp.ge.s32.totalorder %s27, 4
      %s34 = sphi 0, %s53
      %s35 = sphi 0, %s49
      %s36 = sphi 0, %s45
      %s37 = sphi 0, %s34
      %s38 = sphi 0, %s35
      %s39 = sphi 0, %s36
      %s40 = sphi 0, %s37
      %s41 = sphi 0, %s38
      %s42 = sphi 0, %s39
      %s62 = sphi 0, %s64
      %s65 = sphi 0, %s62
      %s66 = sphi 0, %s65
      %s82 = sphi 0, %s66
      %s94 = sphi 0, %s96
      %s97 = sphi 0, %s94
      %s98 = sphi 0, %s97
      %s114 = sphi 0, %s98
      %s120 = sphi 0, %s122
      %s123 = sphi 0, %s120
      %s124 = sphi 0, %s123
      %s140 = sphi 0, %s124
      %s148 = sphi 0, %s150
      %s151 = sphi 0, %s148
      %s152 = sphi 0, %s151
      %s168 = sphi 0, %s152
    $region4: #{tpu_custom_call.1} parent=1 // loop_header_branch
      %30 = sbr.rel (%p28) target = $region8
    $region5: #{tpu_custom_call.1} parent=1 // loop_body
      %s32 = ssub.s32 %s27, 1
      %s33 = ssub.s32 %s27, 2
      %s43 = sadd.s32 1, %s36
      %p44 = scmp.ge.s32.totalorder %s43, 1
      %s45 = scalar_select %p44, 0, %s43
      %s46 = sadd.s32 1, %s35
      %s47 = scalar_select %p44, %s46, %s35
      %p48 = scmp.ge.s32.totalorder %s47, 1
      %s49 = scalar_select %p48, 0, %s47
      %s50 = sadd.s32 1, %s34
      %s51 = scalar_select %p48, %s50, %s34
      %p52 = scmp.ge.s32.totalorder %s51, 2
      %s53 = scalar_select %p52, 0, %s51
      %s54 = sadd.s32 %s34, %s36
      %s55 = sld [smem:[#allocation3 + %s54]]
      %s56 = sadd.s32 %s53, %s45
      %s57 = sld [smem:[#allocation3 + %s56]]
      %s58 = ssub.s32 %s34, %s53
      %s59 = ssub.s32 %s55, %s57
      %s60 = sor.u32 %s58, %s59
      %p61 = scmp.eq.s32.totalorder %s60, 0
      %s63 = sadd.s32 %s62, 1
      %s64 = scalar_select %p61, %s62, %s63
      %p67 = pneg %p61
      %p68 = scmp.eq.s32.totalorder %s27, 1
      %p69 = por %p67, %p68
      %p70 = scmp.ne.s32.totalorder %s62, %s65
      %p71 = scmp.eq.s32.totalorder %s27, 0
      %p72 = por %p70, %p71
      %p73 = scmp.ne.s32.totalorder %s62, %s65
      %p74 = scmp.eq.s32.totalorder %s32, 1
      %p75 = por %p73, %p74
      %p76 = scmp.ne.s32.totalorder %s65, %s66
      %p77 = scmp.eq.s32.totalorder %s32, 0
      %p78 = por %p76, %p77
      %p79 = scmp.ne.s32.totalorder %s65, %s66
      %p80 = scmp.eq.s32.totalorder %s33, 1
      %p81 = por %p79, %p80
      %p83 = scmp.ne.s32.totalorder %s66, %s82
      %p84 = scmp.eq.s32.totalorder %s33, 0
      %p85 = por %p83, %p84
      %s86 = sadd.s32 %s34, %s36
      %s87 = sld [smem:[#allocation3 + %s86]]
      %s88 = sadd.s32 %s53, %s45
      %s89 = sld [smem:[#allocation3 + %s88]]
      %s90 = ssub.s32 %s87, %s89
      %s91 = ssub.s32 %s35, %s49
      %s92 = sor.u32 %s90, %s91
      %p93 = scmp.eq.s32.totalorder %s92, 0
      %s95 = sadd.s32 %s94, 1
      %s96 = scalar_select %p93, %s94, %s95
      %p99 = pneg %p93
      %p100 = scmp.eq.s32.totalorder %s27, 1
      %p101 = por %p99, %p100
      %p102 = scmp.ne.s32.totalorder %s94, %s97
      %p103 = scmp.eq.s32.totalorder %s27, 0
      %p104 = por %p102, %p103
      %p105 = scmp.ne.s32.totalorder %s94, %s97
      %p106 = scmp.eq.s32.totalorder %s32, 1
      %p107 = por %p105, %p106
      %p108 = scmp.ne.s32.totalorder %s97, %s98
      %p109 = scmp.eq.s32.totalorder %s32, 0
      %p110 = por %p108, %p109
      %p111 = scmp.ne.s32.totalorder %s97, %s98
      %p112 = scmp.eq.s32.totalorder %s33, 1
      %p113 = por %p111, %p112
      %p115 = scmp.ne.s32.totalorder %s98, %s114
      %p116 = scmp.eq.s32.totalorder %s33, 0
      %p117 = por %p115, %p116
      %s118 = ssub.s32 %s34, %s53
      %p119 = scmp.eq.s32.totalorder %s118, 0
      %s121 = sadd.s32 %s120, 1
      %s122 = scalar_select %p119, %s120, %s121
      %p125 = pneg %p119
      %p126 = scmp.eq.s32.totalorder %s27, 1
      %p127 = por %p125, %p126
      %p128 = scmp.ne.s32.totalorder %s120, %s123
      %p129 = scmp.eq.s32.totalorder %s27, 0
      %p130 = por %p128, %p129
      %p131 = scmp.ne.s32.totalorder %s120, %s123
      %p132 = scmp.eq.s32.totalorder %s32, 1
      %p133 = por %p131, %p132
      %p134 = scmp.ne.s32.totalorder %s123, %s124
      %p135 = scmp.eq.s32.totalorder %s32, 0
      %p136 = por %p134, %p135
      %p137 = scmp.ne.s32.totalorder %s123, %s124
      %p138 = scmp.eq.s32.totalorder %s33, 1
      %p139 = por %p137, %p138
      %p141 = scmp.ne.s32.totalorder %s124, %s140
      %p142 = scmp.eq.s32.totalorder %s33, 0
      %p143 = por %p141, %p142
      %s144 = ssub.s32 %s34, %s53
      %s145 = ssub.s32 %s35, %s49
      %s146 = sor.u32 %s144, %s145
      %p147 = scmp.eq.s32.totalorder %s146, 0
      %s149 = sadd.s32 %s148, 1
      %s150 = scalar_select %p147, %s148, %s149
      %p153 = pneg %p147
      %p154 = scmp.eq.s32.totalorder %s27, 1
      %p155 = por %p153, %p154
      %p156 = scmp.ne.s32.totalorder %s148, %s151
      %p157 = scmp.eq.s32.totalorder %s27, 0
      %p158 = por %p156, %p157
      %p159 = scmp.ne.s32.totalorder %s148, %s151
      %p160 = scmp.eq.s32.totalorder %s32, 1
      %p161 = por %p159, %p160
      %p162 = scmp.ne.s32.totalorder %s151, %s152
      %p163 = scmp.eq.s32.totalorder %s32, 0
      %p164 = por %p162, %p163
      %p165 = scmp.ne.s32.totalorder %s151, %s152
      %p166 = scmp.eq.s32.totalorder %s33, 1
      %p167 = por %p165, %p166
      %p169 = scmp.ne.s32.totalorder %s152, %s168
      %p170 = scmp.eq.s32.totalorder %s33, 0
      %p171 = por %p169, %p170
      %p172 = scmp.le.s32.totalorder 1, %s27
      %p173 = scmp.lt.s32.totalorder %s27, 3
      %p174 = pnand %p172, %p173
      %p175 = pneg %p174
      // Predicated region
      $region9: #{tpu_custom_call.1} parent=5 // pred_check
        _
      $region10: #{tpu_custom_call.1} parent=5 // pred_check_branch
        %177 = sbr.rel (%p174) target = $region12
      $region11: #{tpu_custom_call.1} parent=5 // pred_region
        %s178 = ssub.s32 %s27, 1
      $region12: #{tpu_custom_call.1} parent=5 // pred_fallthru
        _
      %p179 = scmp.lt.s32.totalorder %s27, 2
      // Predicated region
      $region13: #{tpu_custom_call.1} parent=5 // pred_check
        %p180 = pneg %p179
      $region14: #{tpu_custom_call.1} parent=5 // pred_check_branch
        %182 = sbr.rel (%p180) target = $region16
      $region15: #{tpu_custom_call.1} parent=5 // pred_region
        // Predicated region
        $region17: #{tpu_custom_call.1} parent=15 // pred_check
          %p183 = pneg %p72
        $region18: #{tpu_custom_call.1} parent=15 // pred_check_branch
          %185 = sbr.rel (%p183) target = $region20
        $region19: #{tpu_custom_call.1} parent=15 // pred_region
          %s186 = sadd.s32 %s34, %s36
          %s187 = sld [smem:[#allocation3 + %s186]]
          %s188 = smul.u32 16, %s34
          %s189 = smul.u32 2, %s187
          %p190 = scmp.lt.s32.totalorder %s188, 31
          %s191 = scalar_select %p190, %s188, 31
          %p192 = scmp.lt.s32.totalorder %s189, 1
          %s193 = scalar_select %p192, %s189, 1
          %s194 = smul.addr %s191, 2
          %s195 = sadd.s32 %s193, %s194
          %s196 = smul.addr %s195, 4
          %s197 = scalar_lea.vmem %s2, %s196
          %s198 = sadd.s32 %s34, %s36
          %s199 = sld [smem:[#allocation3 + %s198]]
          %s200 = smul.u32 16, %s34
          %s201 = smul.u32 2, %s199
        $region20: #{tpu_custom_call.1} parent=15 // pred_fallthru
          _
        // Predicated region
        $region21: #{tpu_custom_call.1} parent=15 // pred_check
          %p202 = pneg %p104
        $region22: #{tpu_custom_call.1} parent=15 // pred_check_branch
          %204 = sbr.rel (%p202) target = $region24
        $region23: #{tpu_custom_call.1} parent=15 // pred_region
          %s205 = sand.u32 %s94, 1
          %s206 = scalar_lea.sflag [#allocation6], %s205
          %s207 = sand.u32 %s94, 1
          %s208 = smul.addr %s207, 128
          %s209 = scalar_lea.vmem [#allocation5], %s208
          %s210 = sadd.s32 %s34, %s36
          %s211 = sld [smem:[#allocation3 + %s210]]
          %s212 = smul.u32 32, %s211
          %s214 = ssub.s32 2048, 2048
          %215 = vsyncadd %s206, %s214
          %s216 = sadd.s32 %s35, %s212
          %s217 = smul.addr %s216, 64
          %s218 = scalar_lea.hbm %s3, %s217
          %s219 = sshll.u32 %s209, 4
          %s220 = int_to_ptr.vmem [resolvable:$true] %s219
          %225 = dma.hbm_to_vmem [thread:$0]  %s218, 2048, %s220, %s206, 64, 64, 4
        $region24: #{tpu_custom_call.1} parent=15 // pred_fallthru
          _
        // Predicated region
        $region25: #{tpu_custom_call.1} parent=15 // pred_check
          %p226 = pneg %p130
        $region26: #{tpu_custom_call.1} parent=15 // pred_check_branch
          %228 = sbr.rel (%p226) target = $region28
        $region27: #{tpu_custom_call.1} parent=15 // pred_region
          %s229 = smul.u32 16, %s34
          %p230 = scmp.lt.s32.totalorder %s229, 31
          %s231 = scalar_select %p230, %s229, 31
          %s232 = smul.addr %s231, 8
          %s233 = scalar_lea.vmem %s4, %s232
          %s234 = smul.u32 16, %s34
        $region28: #{tpu_custom_call.1} parent=15 // pred_fallthru
          _
      $region16: #{tpu_custom_call.1} parent=5 // pred_fallthru
        _
      %p235 = scmp.le.s32.totalorder 1, %s27
      %p236 = scmp.lt.s32.totalorder %s27, 3
      %p237 = pnand %p235, %p236
      %p238 = pneg %p237
      // Predicated region
      $region29: #{tpu_custom_call.1} parent=5 // pred_check
        _
      $region30: #{tpu_custom_call.1} parent=5 // pred_check_branch
        %240 = sbr.rel (%p237) target = $region32
      $region31: #{tpu_custom_call.1} parent=5 // pred_region
        %s241 = ssub.s32 %s27, 1
        %s242 = sand.u32 %s97, 1
        %s243 = scalar_lea.sflag [#allocation6], %s242
        %s244 = sand.u32 %s97, 1
        %s245 = smul.addr %s244, 128
        %s246 = scalar_lea.vmem [#allocation5], %s245
        // Predicated region
        $region33: #{tpu_custom_call.1} parent=31 // pred_check
          %p247 = pneg %p110
        $region34: #{tpu_custom_call.1} parent=31 // pred_check_branch
          %249 = sbr.rel (%p247) target = $region36
        $region35: #{tpu_custom_call.1} parent=31 // pred_region
          %250 = dma.done %s243, 2048
        $region36: #{tpu_custom_call.1} parent=31 // pred_fallthru
          _
        %s251 = sadd.s32 %s37, %s39
        %s252 = sld [smem:[#allocation3 + %s251]]
        %s253 = smul.u32 16, %s37
        %s254 = smul.u32 2, %s252
        %p255 = scmp.lt.s32.totalorder %s253, 31
        %s256 = scalar_select %p255, %s253, 31
        %p257 = scmp.lt.s32.totalorder %s254, 1
        %s258 = scalar_select %p257, %s254, 1
        %s259 = smul.addr %s256, 2
        %s260 = sadd.s32 %s258, %s259
        %s261 = smul.addr %s260, 4
        %s262 = scalar_lea.vmem %s2, %s261
        %p263 = pneg %p78
        %p264 = pneg %p75
        %s265 = sand.u32 %s97, 1
        %s266 = scalar_lea.sflag [#allocation6], %s265
        %s267 = sand.u32 %s97, 1
        %s268 = smul.addr %s267, 128
        %s269 = scalar_lea.vmem [#allocation5], %s268
        %p270 = pneg %p110
        %p271 = pneg %p107
        %s272 = smul.u32 16, %s37
        %p273 = scmp.lt.s32.totalorder %s272, 31
        %s274 = scalar_select %p273, %s272, 31
        %s275 = smul.addr %s274, 8
        %s276 = scalar_lea.vmem %s4, %s275
        %p277 = pneg %p136
        %p278 = pneg %p133
        %p279 = pneg %p164
        %p280 = pneg %p161
        %s281 = sand.u32 %s151, 1
        %s282 = scalar_lea.sflag [#allocation7], %s281
        %s283 = sand.u32 %s151, 1
        %s284 = smul.addr %s283, 128
        %s285 = scalar_lea.vmem [#allocation8], %s284
        %s286 = sadd.s32 %s37, %s39
        %s287 = sld [smem:[#allocation3 + %s286]]
        %s288 = smul.u32 16, %s37
        %s289 = smul.u32 2, %s287
        %p290 = scmp.lt.s32.totalorder %s288, 31
        %s291 = scalar_select %p290, %s288, 31
        %p292 = scmp.lt.s32.totalorder %s289, 1
        %s293 = scalar_select %p292, %s289, 1
        %s294 = smul.addr %s291, 2
        %s295 = sadd.s32 %s293, %s294
        %s296 = smul.addr %s295, 4
        %s297 = scalar_lea.vmem %s2, %s296
        %s298 = sadd.s32 %s37, %s39
        %s299 = sld [smem:[#allocation3 + %s298]]
        %s300 = smul.u32 16, %s37
        %s301 = smul.u32 2, %s299
        %s302 = sadd.s32 %s37, %s39
        %s303 = sld [smem:[#allocation3 + %s302]]
        %s304 = smul.u32 32, %s303
        %s305 = smul.u32 16, %s37
        %p306 = scmp.lt.s32.totalorder %s305, 31
        %s307 = scalar_select %p306, %s305, 31
        %s308 = smul.addr %s307, 8
        %s309 = scalar_lea.vmem %s4, %s308
        %s310 = smul.u32 16, %s37
        %s311 = smul.u32 16, %s37
        %v313 = vld [vmem:[%s297] sm:$0xff]
        %v314 = vld [vmem:[%s297 + $0x8] sm:$0xff]
        %v315 = vld [vmem:[%s297 + $0x10] sm:$0xff]
        %v316 = vld [vmem:[%s297 + $0x18] sm:$0xff]
        %v317 = vld [vmem:[%s297 + $0x20] sm:$0xff]
        %v318 = vld [vmem:[%s297 + $0x28] sm:$0xff]
        %v319 = vld [vmem:[%s297 + $0x30] sm:$0xff]
        %v320 = vld [vmem:[%s297 + $0x38] sm:$0xff]
        %v321 = vld [vmem:[%s297 + $0x40] sm:$0xff]
        %v322 = vld [vmem:[%s297 + $0x48] sm:$0xff]
        %v323 = vld [vmem:[%s297 + $0x50] sm:$0xff]
        %v324 = vld [vmem:[%s297 + $0x58] sm:$0xff]
        %v325 = vld [vmem:[%s297 + $0x60] sm:$0xff]
        %v326 = vld [vmem:[%s297 + $0x68] sm:$0xff]
        %v327 = vld [vmem:[%s297 + $0x70] sm:$0xff]
        %v328 = vld [vmem:[%s297 + $0x78] sm:$0xff]
        %v329 = vld [vmem:[%s246] sm:$0xf]
        %v330 = vld [vmem:[%s246 + $0x4] sm:$0xf]
        %v331 = vld [vmem:[%s246 + $0x8] sm:$0xf]
        %v332 = vld [vmem:[%s246 + $0xc] sm:$0xf]
        %v333 = vld [vmem:[%s246 + $0x10] sm:$0xf]
        %v334 = vld [vmem:[%s246 + $0x14] sm:$0xf]
        %v335 = vld [vmem:[%s246 + $0x18] sm:$0xf]
        %v336 = vld [vmem:[%s246 + $0x1c] sm:$0xf]
        %v337 = vld [vmem:[%s246 + $0x20] sm:$0xf]
        %v338 = vld [vmem:[%s246 + $0x24] sm:$0xf]
        %v339 = vld [vmem:[%s246 + $0x28] sm:$0xf]
        %v340 = vld [vmem:[%s246 + $0x2c] sm:$0xf]
        %v341 = vld [vmem:[%s246 + $0x30] sm:$0xf]
        %v342 = vld [vmem:[%s246 + $0x34] sm:$0xf]
        %v343 = vld [vmem:[%s246 + $0x38] sm:$0xf]
        %v344 = vld [vmem:[%s246 + $0x3c] sm:$0xf]
        %v345 = vld [vmem:[%s246 + $0x40] sm:$0xf]
        %v346 = vld [vmem:[%s246 + $0x44] sm:$0xf]
        %v347 = vld [vmem:[%s246 + $0x48] sm:$0xf]
        %v348 = vld [vmem:[%s246 + $0x4c] sm:$0xf]
        %v349 = vld [vmem:[%s246 + $0x50] sm:$0xf]
        %v350 = vld [vmem:[%s246 + $0x54] sm:$0xf]
        %v351 = vld [vmem:[%s246 + $0x58] sm:$0xf]
        %v352 = vld [vmem:[%s246 + $0x5c] sm:$0xf]
        %v353 = vld [vmem:[%s246 + $0x60] sm:$0xf]
        %v354 = vld [vmem:[%s246 + $0x64] sm:$0xf]
        %v355 = vld [vmem:[%s246 + $0x68] sm:$0xf]
        %v356 = vld [vmem:[%s246 + $0x6c] sm:$0xf]
        %v357 = vld [vmem:[%s246 + $0x70] sm:$0xf]
        %v358 = vld [vmem:[%s246 + $0x74] sm:$0xf]
        %v359 = vld [vmem:[%s246 + $0x78] sm:$0xf]
        %v360 = vld [vmem:[%s246 + $0x7c] sm:$0xf]
        %v361 = vld [vmem:[%s309] sm:$0xff]
        %v362 = vld [vmem:[%s309 + $0x8] sm:$0xff]
        %v363 = vld [vmem:[%s309 + $0x10] sm:$0xff]
        %v364 = vld [vmem:[%s309 + $0x18] sm:$0xff]
        %v365 = vld [vmem:[%s309 + $0x20] sm:$0xff]
        %v366 = vld [vmem:[%s309 + $0x28] sm:$0xff]
        %v367 = vld [vmem:[%s309 + $0x30] sm:$0xff]
        %v368 = vld [vmem:[%s309 + $0x38] sm:$0xff]
        %v369 = vld [vmem:[%s309 + $0x40] sm:$0xff]
        %v370 = vld [vmem:[%s309 + $0x48] sm:$0xff]
        %v371 = vld [vmem:[%s309 + $0x50] sm:$0xff]
        %v372 = vld [vmem:[%s309 + $0x58] sm:$0xff]
        %v373 = vld [vmem:[%s309 + $0x60] sm:$0xff]
        %v374 = vld [vmem:[%s309 + $0x68] sm:$0xff]
        %v375 = vld [vmem:[%s309 + $0x70] sm:$0xff]
        %v376 = vld [vmem:[%s309 + $0x78] sm:$0xff]
        %378 = vset.pattern.permute.xlu0 0
        %379 = vperm.xlu0 %378, %v361
        %v380 = vpop.permute.xlu0 %379
        %383 = vset.pattern.permute.xlu0 0
        %384 = vperm.xlu0 %383, %v362
        %v385 = vpop.permute.xlu0 %384
        %388 = vset.pattern.permute.xlu0 0
        %389 = vperm.xlu0 %388, %v363
        %v390 = vpop.permute.xlu0 %389
        %393 = vset.pattern.permute.xlu0 0
        %394 = vperm.xlu0 %393, %v364
        %v395 = vpop.permute.xlu0 %394
        %398 = vset.pattern.permute.xlu0 0
        %399 = vperm.xlu0 %398, %v365
        %v400 = vpop.permute.xlu0 %399
        %403 = vset.pattern.permute.xlu0 0
        %404 = vperm.xlu0 %403, %v366
        %v405 = vpop.permute.xlu0 %404
        %408 = vset.pattern.permute.xlu0 0
        %409 = vperm.xlu0 %408, %v367
        %v410 = vpop.permute.xlu0 %409
        %413 = vset.pattern.permute.xlu0 0
        %414 = vperm.xlu0 %413, %v368
        %v415 = vpop.permute.xlu0 %414
        %418 = vset.pattern.permute.xlu0 0
        %419 = vperm.xlu0 %418, %v369
        %v420 = vpop.permute.xlu0 %419
        %423 = vset.pattern.permute.xlu0 0
        %424 = vperm.xlu0 %423, %v370
        %v425 = vpop.permute.xlu0 %424
        %428 = vset.pattern.permute.xlu0 0
        %429 = vperm.xlu0 %428, %v371
        %v430 = vpop.permute.xlu0 %429
        %433 = vset.pattern.permute.xlu0 0
        %434 = vperm.xlu0 %433, %v372
        %v435 = vpop.permute.xlu0 %434
        %438 = vset.pattern.permute.xlu0 0
        %439 = vperm.xlu0 %438, %v373
        %v440 = vpop.permute.xlu0 %439
        %443 = vset.pattern.permute.xlu0 0
        %444 = vperm.xlu0 %443, %v374
        %v445 = vpop.permute.xlu0 %444
        %448 = vset.pattern.permute.xlu0 0
        %449 = vperm.xlu0 %448, %v375
        %v450 = vpop.permute.xlu0 %449
        %453 = vset.pattern.permute.xlu0 0
        %454 = vperm.xlu0 %453, %v376
        %v455 = vpop.permute.xlu0 %454
        %v473 = vunpack.c.l.b16 %v313
        %v474 = vunpack.c.h.b16 %v313
        %v475 = vunpack.c.l.b16 %v314
        %v476 = vunpack.c.h.b16 %v314
        %v477 = vunpack.c.l.b16 %v315
        %v478 = vunpack.c.h.b16 %v315
        %v479 = vunpack.c.l.b16 %v316
        %v480 = vunpack.c.h.b16 %v316
        %v481 = vunpack.c.l.b16 %v317
        %v482 = vunpack.c.h.b16 %v317
        %v483 = vunpack.c.l.b16 %v318
        %v484 = vunpack.c.h.b16 %v318
        %v485 = vunpack.c.l.b16 %v319
        %v486 = vunpack.c.h.b16 %v319
        %v487 = vunpack.c.l.b16 %v320
        %v488 = vunpack.c.h.b16 %v320
        %v489 = vunpack.c.l.b16 %v321
        %v490 = vunpack.c.h.b16 %v321
        %v491 = vunpack.c.l.b16 %v322
        %v492 = vunpack.c.h.b16 %v322
        %v493 = vunpack.c.l.b16 %v323
        %v494 = vunpack.c.h.b16 %v323
        %v495 = vunpack.c.l.b16 %v324
        %v496 = vunpack.c.h.b16 %v324
        %v497 = vunpack.c.l.b16 %v325
        %v498 = vunpack.c.h.b16 %v325
        %v499 = vunpack.c.l.b16 %v326
        %v500 = vunpack.c.h.b16 %v326
        %v501 = vunpack.c.l.b16 %v327
        %v502 = vunpack.c.h.b16 %v327
        %v503 = vunpack.c.l.b16 %v328
        %v504 = vunpack.c.h.b16 %v328
        %v505 = vpack.c.b16 %v475, %v473
        %v506 = vpack.c.b16 %v476, %v474
        %v507 = vpack.c.b16 %v479, %v477
        %v508 = vpack.c.b16 %v480, %v478
        %v509 = vpack.c.b16 %v483, %v481
        %v510 = vpack.c.b16 %v484, %v482
        %v511 = vpack.c.b16 %v487, %v485
        %v512 = vpack.c.b16 %v488, %v486
        %v513 = vpack.c.b16 %v491, %v489
        %v514 = vpack.c.b16 %v492, %v490
        %v515 = vpack.c.b16 %v495, %v493
        %v516 = vpack.c.b16 %v496, %v494
        %v517 = vpack.c.b16 %v499, %v497
        %v518 = vpack.c.b16 %v500, %v498
        %v519 = vpack.c.b16 %v503, %v501
        %v520 = vpack.c.b16 %v504, %v502
        %v569 = vunpack.c.l.b16 %v329
        %v570 = vunpack.c.l.b16 %v330
        %v571 = vunpack.c.l.b16 %v331
        %v572 = vunpack.c.l.b16 %v332
        %v573 = vunpack.c.l.b16 %v333
        %v574 = vunpack.c.l.b16 %v334
        %v575 = vunpack.c.l.b16 %v335
        %v576 = vunpack.c.l.b16 %v336
        %v577 = vunpack.c.l.b16 %v337
        %v578 = vunpack.c.l.b16 %v338
        %v579 = vunpack.c.l.b16 %v339
        %v580 = vunpack.c.l.b16 %v340
        %v581 = vunpack.c.l.b16 %v341
        %v582 = vunpack.c.l.b16 %v342
        %v583 = vunpack.c.l.b16 %v343
        %v584 = vunpack.c.l.b16 %v344
        %v585 = vunpack.c.l.b16 %v345
        %v586 = vunpack.c.l.b16 %v346
        %v587 = vunpack.c.l.b16 %v347
        %v588 = vunpack.c.l.b16 %v348
        %v589 = vunpack.c.l.b16 %v349
        %v590 = vunpack.c.l.b16 %v350
        %v591 = vunpack.c.l.b16 %v351
        %v592 = vunpack.c.l.b16 %v352
        %v593 = vunpack.c.l.b16 %v353
        %v594 = vunpack.c.l.b16 %v354
        %v595 = vunpack.c.l.b16 %v355
        %v596 = vunpack.c.l.b16 %v356
        %v597 = vunpack.c.l.b16 %v357
        %v598 = vunpack.c.l.b16 %v358
        %v599 = vunpack.c.l.b16 %v359
        %v600 = vunpack.c.l.b16 %v360
        %v601 = vpack.c.b16 %v570, %v569
        %v602 = vpack.c.b16 %v572, %v571
        %v603 = vpack.c.b16 %v574, %v573
        %v604 = vpack.c.b16 %v576, %v575
        %v605 = vpack.c.b16 %v578, %v577
        %v606 = vpack.c.b16 %v580, %v579
        %v607 = vpack.c.b16 %v582, %v581
        %v608 = vpack.c.b16 %v584, %v583
        %v609 = vpack.c.b16 %v586, %v585
        %v610 = vpack.c.b16 %v588, %v587
        %v611 = vpack.c.b16 %v590, %v589
        %v612 = vpack.c.b16 %v592, %v591
        %v613 = vpack.c.b16 %v594, %v593
        %v614 = vpack.c.b16 %v596, %v595
        %v615 = vpack.c.b16 %v598, %v597
        %v616 = vpack.c.b16 %v600, %v599
        %633 = vmatprep.subr.bf16.mxu0 0
        %634 = vmatpush1.bf16.msra.mxu0 %v601
        %635 = vmatprep.subr.bf16.mxu0 0
        %636 = vmatpush1.bf16.msra.mxu0 %v602
        %637 = vmatprep.subr.bf16.mxu0 0
        %638 = vmatpush1.bf16.msra.mxu0 %v603
        %639 = vmatprep.subr.bf16.mxu0 0
        %640 = vmatpush1.bf16.msra.mxu0 %v604
        %641 = vmatprep.subr.bf16.mxu0 0
        %642 = vmatpush1.bf16.msra.mxu0 %v605
        %643 = vmatprep.subr.bf16.mxu0 0
        %644 = vmatpush1.bf16.msra.mxu0 %v606
        %645 = vmatprep.subr.bf16.mxu0 0
        %646 = vmatpush1.bf16.msra.mxu0 %v607
        %647 = vmatprep.subr.bf16.mxu0 0
        %648 = vmatpush1.bf16.msra.mxu0 %v608
        %649 = vmatprep.subr.bf16.mxu0 0
        %650 = vmatpush1.bf16.msra.mxu0 %v609
        %651 = vmatprep.subr.bf16.mxu0 0
        %652 = vmatpush1.bf16.msra.mxu0 %v610
        %653 = vmatprep.subr.bf16.mxu0 0
        %654 = vmatpush1.bf16.msra.mxu0 %v611
        %655 = vmatprep.subr.bf16.mxu0 0
        %656 = vmatpush1.bf16.msra.mxu0 %v612
        %657 = vmatprep.subr.bf16.mxu0 0
        %658 = vmatpush1.bf16.msra.mxu0 %v613
        %659 = vmatprep.subr.bf16.mxu0 0
        %660 = vmatpush1.bf16.msra.mxu0 %v614
        %661 = vmatprep.subr.bf16.mxu0 0
        %662 = vmatpush1.bf16.msra.mxu0 %v615
        %663 = vmatprep.subr.bf16.mxu0 0
        %664 = vmatpush1.bf16.msra.mxu0 %v616
        %665 = vmatprep.mubr.bf16.mxu0 %v506
        %666 = vmatmul.mubr.bf16.gmra.mrb[0].mxu0 %v505
        %v667 = vpop.f32.mrb[0].mxu0
        %v668 = vadd.f32 %v380, %v667
        %v669 = vpop.f32.mrb[0].mxu0
        %v670 = vpop.f32.mrb[0].mxu0
        %v671 = vadd.f32 %v385, %v670
        %v672 = vpop.f32.mrb[0].mxu0
        %673 = vmatprep.mubr.bf16.mxu0 %v508
        %674 = vmatmul.mubr.bf16.gmra.mrb[0].mxu0 %v507
        %v675 = vpop.f32.mrb[0].mxu0
        %v676 = vadd.f32 %v390, %v675
        %v677 = vpop.f32.mrb[0].mxu0
        %v678 = vpop.f32.mrb[0].mxu0
        %v679 = vadd.f32 %v395, %v678
        %v680 = vpop.f32.mrb[0].mxu0
        %681 = vmatprep.mubr.bf16.mxu0 %v510
        %682 = vmatmul.mubr.bf16.gmra.mrb[0].mxu0 %v509
        %v683 = vpop.f32.mrb[0].mxu0
        %v684 = vadd.f32 %v400, %v683
        %v685 = vpop.f32.mrb[0].mxu0
        %v686 = vpop.f32.mrb[0].mxu0
        %v687 = vadd.f32 %v405, %v686
        %v688 = vpop.f32.mrb[0].mxu0
        %689 = vmatprep.mubr.bf16.mxu0 %v512
        %690 = vmatmul.mubr.bf16.gmra.mrb[0].mxu0 %v511
        %v691 = vpop.f32.mrb[0].mxu0
        %v692 = vadd.f32 %v410, %v691
        %v693 = vpop.f32.mrb[0].mxu0
        %v694 = vpop.f32.mrb[0].mxu0
        %v695 = vadd.f32 %v415, %v694
        %v696 = vpop.f32.mrb[0].mxu0
        %697 = vmatprep.mubr.bf16.mxu0 %v514
        %698 = vmatmul.mubr.bf16.gmra.mrb[0].mxu0 %v513
        %v699 = vpop.f32.mrb[0].mxu0
        %v700 = vadd.f32 %v420, %v699
        %v701 = vpop.f32.mrb[0].mxu0
        %v702 = vpop.f32.mrb[0].mxu0
        %v703 = vadd.f32 %v425, %v702
        %v704 = vpop.f32.mrb[0].mxu0
        %705 = vmatprep.mubr.bf16.mxu0 %v516
        %706 = vmatmul.mubr.bf16.gmra.mrb[0].mxu0 %v515
        %v707 = vpop.f32.mrb[0].mxu0
        %v708 = vadd.f32 %v430, %v707
        %v709 = vpop.f32.mrb[0].mxu0
        %v710 = vpop.f32.mrb[0].mxu0
        %v711 = vadd.f32 %v435, %v710
        %v712 = vpop.f32.mrb[0].mxu0
        %713 = vmatprep.mubr.bf16.mxu0 %v518
        %714 = vmatmul.mubr.bf16.gmra.mrb[0].mxu0 %v517
        %v715 = vpop.f32.mrb[0].mxu0
        %v716 = vadd.f32 %v440, %v715
        %v717 = vpop.f32.mrb[0].mxu0
        %v718 = vpop.f32.mrb[0].mxu0
        %v719 = vadd.f32 %v445, %v718
        %v720 = vpop.f32.mrb[0].mxu0
        %721 = vmatprep.mubr.bf16.mxu0 %v520
        %722 = vmatmul.mubr.bf16.gmra.mrb[0].mxu0 %v519
        %v723 = vpop.f32.mrb[0].mxu0
        %v724 = vadd.f32 %v450, %v723
        %v725 = vpop.f32.mrb[0].mxu0
        %v726 = vpop.f32.mrb[0].mxu0
        %v727 = vadd.f32 %v455, %v726
        %v728 = vpop.f32.mrb[0].mxu0
        %729 = vdwg.mxu0
        %730 = vst [vmem:[%s285] sm:$0xff] %v668
        %731 = vst [vmem:[%s285 + $0x8] sm:$0xff] %v671
        %732 = vst [vmem:[%s285 + $0x10] sm:$0xff] %v676
        %733 = vst [vmem:[%s285 + $0x18] sm:$0xff] %v679
        %734 = vst [vmem:[%s285 + $0x20] sm:$0xff] %v684
        %735 = vst [vmem:[%s285 + $0x28] sm:$0xff] %v687
        %736 = vst [vmem:[%s285 + $0x30] sm:$0xff] %v692
        %737 = vst [vmem:[%s285 + $0x38] sm:$0xff] %v695
        %738 = vst [vmem:[%s285 + $0x40] sm:$0xff] %v700
        %739 = vst [vmem:[%s285 + $0x48] sm:$0xff] %v703
        %740 = vst [vmem:[%s285 + $0x50] sm:$0xff] %v708
        %741 = vst [vmem:[%s285 + $0x58] sm:$0xff] %v711
        %742 = vst [vmem:[%s285 + $0x60] sm:$0xff] %v716
        %743 = vst [vmem:[%s285 + $0x68] sm:$0xff] %v719
        %744 = vst [vmem:[%s285 + $0x70] sm:$0xff] %v724
        %745 = vst [vmem:[%s285 + $0x78] sm:$0xff] %v727
        %s746 = sand.u32 %s151, 1
        %s747 = scalar_lea.sflag [#allocation7], %s746
        %s748 = sand.u32 %s151, 1
        %s749 = smul.addr %s748, 128
        %s750 = scalar_lea.vmem [#allocation8], %s749
        // Predicated region
        $region37: #{tpu_custom_call.1} parent=31 // pred_check
          %p751 = pneg %p161
        $region38: #{tpu_custom_call.1} parent=31 // pred_check_branch
          %753 = sbr.rel (%p751) target = $region40
        $region39: #{tpu_custom_call.1} parent=31 // pred_region
          %s754 = smul.u32 16, %s37
          %s756 = ssub.s32 2048, 2048
          %757 = vsyncadd %s747, %s756
          %s758 = sadd.s32 %s38, %s754
          %s759 = smul.addr %s758, 128
          %s760 = scalar_lea.hbm %s5, %s759
          %s761 = sshll.u32 %s750, 4
          %s762 = int_to_ptr.vmem [resolvable:$true] %s761
          %767 = dma.vmem_to_hbm [thread:$0]  %s762, 2048, %s760, %s747, 128, 128, 8
        $region40: #{tpu_custom_call.1} parent=31 // pred_fallthru
          _
      $region32: #{tpu_custom_call.1} parent=5 // pred_fallthru
        _
      %p768 = scmp.le.s32.totalorder 2, %s27
      // Predicated region
      $region41: #{tpu_custom_call.1} parent=5 // pred_check
        %p769 = pneg %p768
      $region42: #{tpu_custom_call.1} parent=5 // pred_check_branch
        %771 = sbr.rel (%p769) target = $region44
      $region43: #{tpu_custom_call.1} parent=5 // pred_region
        %s772 = ssub.s32 %s27, 2
        // Predicated region
        $region45: #{tpu_custom_call.1} parent=43 // pred_check
          %p773 = pneg %p167
        $region46: #{tpu_custom_call.1} parent=43 // pred_check_branch
          %775 = sbr.rel (%p773) target = $region48
        $region47: #{tpu_custom_call.1} parent=43 // pred_region
          %s776 = sand.u32 %s152, 1
          %s777 = scalar_lea.sflag [#allocation7], %s776
          %s778 = sand.u32 %s152, 1
          %s779 = smul.addr %s778, 128
          %s780 = scalar_lea.vmem [#allocation8], %s779
          %781 = dma.done %s777, 2048
        $region48: #{tpu_custom_call.1} parent=43 // pred_fallthru
          _
      $region44: #{tpu_custom_call.1} parent=5 // pred_fallthru
        _
    $region6: #{tpu_custom_call.1} parent=1 // loop_footer
      %s31 = sadd.s32 1, %s27
    $region7: #{tpu_custom_call.1} parent=1 // loop_footer_branch
      %26 = sbr.rel target = $region3
    $region8: #{tpu_custom_call.1} parent=1 // loop_exit
      _
    %782 = vsyncpa [#allocation6], 1
    %s783 = scalar_lea.sflag [#allocation6], 1
    %784 = vsyncpa %s783, 1
    %785 = vsyncpa [#allocation7], 1
    %s786 = scalar_lea.sflag [#allocation7], 1
    %787 = vsyncpa %s786, 1

</llo_original>
